<compile_context>
chip_gen: v7x
topology: tpu7x:2x2x1
jax: 0.10.0
libtpu: 0.0.40
codegen_flags: <defaults>
</compile_context>

<pallas_src>
import jax
import jax.numpy as jnp
from jax.experimental import pallas as pl
from jax.experimental.pallas import tpu as pltpu

EPS = 1e-5

_VMEM_LIMIT_BYTES = 32 * 1024 * 1024   # explicit scoped-VMEM limit (safe on v5e/v6e/v7x)
_VMEM_BUDGET_BYTES = 24 * 1024 * 1024  # working-set budget (headroom under the limit)
_MAX_LANE_TILE = 2048                  # cap on channel tile width (lanes)
_BYTES_F32 = 4
# Block-sized buffers per grid step:
#   single pass: 2x double-buffered input + 2x output + ~2 in-kernel temporaries
#   two pass   : 2x input + 2x output (+ small temporaries)
_SINGLE_PASS_BUFS = 6
_TWO_PASS_BUFS = 5


# ----------------------------------------------------------------------------
# Kernels
# ----------------------------------------------------------------------------
def _bn_fused_kernel(x_ref, gamma_ref, beta_ref, o_ref):
    """Single-pass: the full batch for one channel tile lives in the block."""
    x = x_ref[...].astype(jnp.float32)                            # (N, C_TILE)
    inv_n = jnp.float32(1.0 / x.shape[0])
    mean = jnp.sum(x, axis=0, keepdims=True) * inv_n              # (1, C_TILE)
    centered = x - mean
    var = jnp.sum(centered * centered, axis=0, keepdims=True) * inv_n  # biased
    scale = gamma_ref[...].astype(jnp.float32) * jax.lax.rsqrt(var + EPS)
    shift = beta_ref[...].astype(jnp.float32) - mean * scale
    o_ref[...] = (x * scale + shift).astype(o_ref.dtype)          # folded affine


def _bn_stats_kernel(x_ref, sum_ref, sumsq_ref, acc_sum, acc_sq):
    """Two-pass, pass 1: per-channel sum / sum-of-squares over N tiles."""
    ni = pl.program_id(1)  # reduction axis (last grid dim)

    @pl.when(ni == 0)
    def _init():
        acc_sum[...] = jnp.zeros_like(acc_sum)
        acc_sq[...] = jnp.zeros_like(acc_sq)

    x = x_ref[...].astype(jnp.float32)                            # (N_TILE, C_TILE)
    acc_sum[...] += jnp.sum(x, axis=0, keepdims=True)
    acc_sq[...] += jnp.sum(x * x, axis=0, keepdims=True)

    @pl.when(ni == pl.num_programs(1) - 1)
    def _finalize():
        sum_ref[...] = acc_sum[...]
        sumsq_ref[...] = acc_sq[...]


def _bn_apply_kernel(x_ref, scale_ref, shift_ref, o_ref):
    """Two-pass, pass 2: y = x * scale + shift (scale/shift broadcast over N)."""
    x = x_ref[...].astype(jnp.float32)
    o_ref[...] = (x * scale_ref[...] + shift_ref[...]).astype(o_ref.dtype)


# ----------------------------------------------------------------------------
# Tiling helpers
# ----------------------------------------------------------------------------
def _round_up(a, b):
    return ((a + b - 1) // b) * b


def _pick_c_tile(c, max_lanes):
    """Largest multiple of 128 that divides c, capped at max_lanes.

    Falls back to the full channel extent when C is not 128-aligned (a block
    whose last dim equals the full array dim is always legal, just not
    lane-dense).
    """
    if c % 128 != 0:
        # For tiny production C, pad C to 128 on the wrapper side for
        # lane-dense unmasked stores; not needed for correctness.
        return c
    best = 128
    t = 128
    cap = min(c, max_lanes)
    while t <= cap:
        if c % t == 0:
            best = t
        t += 128
    return best


# ----------------------------------------------------------------------------
# Wrappers
# ----------------------------------------------------------------------------
def _bn_single_pass(x, gamma2d, beta2d, c_tile):
    n, c = x.shape
    return pl.pallas_call(
        _bn_fused_kernel,
        out_shape=jax.ShapeDtypeStruct((n, c), x.dtype),
        grid=(c // c_tile,),
        in_specs=[
            pl.BlockSpec((n, c_tile), lambda j: (0, j)),
            pl.BlockSpec((1, c_tile), lambda j: (0, j)),
            pl.BlockSpec((1, c_tile), lambda j: (0, j)),
        ],
        out_specs=pl.BlockSpec((n, c_tile), lambda j: (0, j)),
        compiler_params=pltpu.CompilerParams(
            dimension_semantics=("parallel",),
            vmem_limit_bytes=_VMEM_LIMIT_BYTES,
        ),
    )(x, gamma2d, beta2d)


def _bn_two_pass(x, gamma2d, beta2d):
    n, c = x.shape
    c_tile = _pick_c_tile(c, 1024)
    max_rows = max(
        8, (_VMEM_BUDGET_BYTES // (_TWO_PASS_BUFS * c_tile * _BYTES_F32)) // 8 * 8
    )
    n_tile = min(1024, max_rows, _round_up(n, 8))
    if n <= n_tile:
        n_pad = _round_up(n, 8)
        n_tile = n_pad
    else:
        n_pad = _round_up(n, n_tile)
    x_p = x if n_pad == n else jnp.pad(x, ((0, n_pad - n), (0, 0)))

    grid = (c // c_tile, n_pad // n_tile)

    # Pass 1: per-channel sum / sum-of-squares. Zero-padded rows contribute
    # nothing, and we divide by the true N below, so the stats are exact.
    s, ss = pl.pallas_call(
        _bn_stats_kernel,
        out_shape=(
            jax.ShapeDtypeStruct((1, c), jnp.float32),
            jax.ShapeDtypeStruct((1, c), jnp.float32),
        ),
        grid=grid,
        in_specs=[pl.BlockSpec((n_tile, c_tile), lambda j, i: (i, j))],
        out_specs=(
            pl.BlockSpec((1, c_tile), lambda j, i: (0, j)),
            pl.BlockSpec((1, c_tile), lambda j, i: (0, j)),
        ),
        scratch_shapes=[
            pltpu.VMEM((1, c_tile), jnp.float32),
            pltpu.VMEM((1, c_tile), jnp.float32),
        ],
        compiler_params=pltpu.CompilerParams(
            dimension_semantics=("parallel", "arbitrary"),
            vmem_limit_bytes=_VMEM_LIMIT_BYTES,
        ),
    )(x_p)

    inv_n = jnp.float32(1.0 / n)
    mean = s * inv_n
    var = ss * inv_n - mean * mean                 # biased variance
    scale = gamma2d * jax.lax.rsqrt(var + EPS)     # folded affine
    shift = beta2d - mean * scale

    # Pass 2: stream x again and apply y = x * scale + shift.
    y = pl.pallas_call(
        _bn_apply_kernel,
        out_shape=jax.ShapeDtypeStruct((n_pad, c), x.dtype),
        grid=grid,
        in_specs=[
            pl.BlockSpec((n_tile, c_tile), lambda j, i: (i, j)),
            pl.BlockSpec((1, c_tile), lambda j, i: (0, j)),
            pl.BlockSpec((1, c_tile), lambda j, i: (0, j)),
        ],
        out_specs=pl.BlockSpec((n_tile, c_tile), lambda j, i: (i, j)),
        compiler_params=pltpu.CompilerParams(
            dimension_semantics=("parallel", "parallel"),
            vmem_limit_bytes=_VMEM_LIMIT_BYTES,
        ),
    )(x_p, scale, shift)
    return y[:n] if n_pad != n else y


def batch_norm_layer(x, gamma, beta, *, force_two_pass=False):
    """BatchNorm1d training-mode forward. x: (N, C); gamma/beta: (C,)."""
    n, c = x.shape
    gamma2d = gamma.reshape(1, c).astype(jnp.float32)
    beta2d = beta.reshape(1, c).astype(jnp.float32)

    # Smallest lane tile the single-pass (whole-batch-per-channel-tile) path
    # could use.
    min_lanes = 128 if c % 128 == 0 else c
    fits_single = (_SINGLE_PASS_BUFS * n * min_lanes * _BYTES_F32) <= _VMEM_BUDGET_BYTES

    if fits_single and not force_two_pass:
        max_lanes = _VMEM_BUDGET_BYTES // (_SINGLE_PASS_BUFS * n * _BYTES_F32)
        c_tile = _pick_c_tile(c, min(max_lanes, _MAX_LANE_TILE))
        return _bn_single_pass(x, gamma2d, beta2d, c_tile)

    # Batch too large to keep resident next to a lane-dense channel tile:
    # two-pass sum/sum-sq reduction over N tiles, then a normalize pass.
    return _bn_two_pass(x, gamma2d, beta2d)


def _reference(x, gamma, beta):
    mean = jnp.mean(x, axis=0, keepdims=True)
    var = jnp.mean((x - mean) ** 2, axis=0, keepdims=True)
    return (x - mean) / jnp.sqrt(var + EPS) * gamma[None, :] + beta[None, :]


if __name__ == "__main__":
    # Primary small-shape test consistent with BatchNorm1d(n_in=32).
    key = jax.random.PRNGKey(0)
    kx, kg, kb = jax.random.split(key, 3)
    N, C = 8, 32
    x = jax.random.normal(kx, (N, C), dtype=jnp.float32)
    gamma = 1.0 + 0.1 * jax.random.normal(kg, (C,), dtype=jnp.float32)
    beta = 0.1 * jax.random.normal(kb, (C,), dtype=jnp.float32)

    out = jax.block_until_ready(batch_norm_layer(x, gamma, beta))
    assert out.shape == (N, C)
    assert jnp.allclose(out, _reference(x, gamma, beta), atol=1e-4, rtol=1e-4)

    # Channel-tiled single-pass path (grid over lane-dense 2048-wide tiles).
    k2x, k2g, k2b = jax.random.split(jax.random.PRNGKey(1), 3)
    N2, C2 = 512, 4096
    x2 = jax.random.normal(k2x, (N2, C2), dtype=jnp.float32)
    g2 = 1.0 + 0.1 * jax.random.normal(k2g, (C2,), dtype=jnp.float32)
    b2 = 0.1 * jax.random.normal(k2b, (C2,), dtype=jnp.float32)
    out2 = jax.block_until_ready(batch_norm_layer(x2, g2, b2))
    assert jnp.allclose(out2, _reference(x2, g2, b2), atol=1e-4, rtol=1e-4)

    # Two-pass (large-N) path, including N padding (2052 is not a multiple of
    # the 1024-row tile).
    k3x, k3g, k3b = jax.random.split(jax.random.PRNGKey(2), 3)
    N3, C3 = 2052, 256
    x3 = jax.random.normal(k3x, (N3, C3), dtype=jnp.float32)
    g3 = 1.0 + 0.1 * jax.random.normal(k3g, (C3,), dtype=jnp.float32)
    b3 = 0.1 * jax.random.normal(k3b, (C3,), dtype=jnp.float32)
    out3 = jax.block_until_ready(batch_norm_layer(x3, g3, b3, force_two_pass=True))
    assert out3.shape == (N3, C3)
    assert jnp.allclose(out3, _reference(x3, g3, b3), atol=1e-4, rtol=1e-4)

    print("KERNEL_OK")
</pallas_src>

<mosaic_0001>
module attributes {stable_mosaic.version = 11 : i64} {
  func.func @_bn_fused_kernel(%arg0: i32, %arg1: memref<8x32xf32, #tpu.memory_space<vmem>>, %arg2: memref<1x32xf32, #tpu.memory_space<vmem>>, %arg3: memref<1x32xf32, #tpu.memory_space<vmem>>, %arg4: memref<8x32xf32, #tpu.memory_space<vmem>>) attributes {dimension_semantics = [#tpu.dimension_semantics<parallel>], iteration_bounds = array<i64: 1>, scalar_prefetch = 0 : i64, scratch_operands = 0 : i64, tpu.core_type = #tpu.core_type<tc>, window_params = [{transform_indices = @transform_0, window_bounds = array<i64: 8, 32>}, {transform_indices = @transform_1, window_bounds = array<i64: 1, 32>}, {transform_indices = @transform_2, window_bounds = array<i64: 1, 32>}, {transform_indices = @transform_3, window_bounds = array<i64: 8, 32>}]} {
    %c0 = arith.constant 0 : index
    %c0_0 = arith.constant 0 : index
    %0 = vector.load %arg1[%c0, %c0_0] : memref<8x32xf32, #tpu.memory_space<vmem>>, vector<8x32xf32>
    %cst = arith.constant dense<0.000000e+00> : vector<32xf32>
    %1 = vector.multi_reduction <add>, %0, %cst [0] : vector<8x32xf32> to vector<32xf32>
    %2 = vector.shape_cast %1 : vector<32xf32> to vector<1x32xf32>
    %cst_1 = arith.constant 1.250000e-01 : f32
    %3 = vector.broadcast %cst_1 : f32 to vector<1x32xf32>
    %4 = arith.mulf %2, %3 : vector<1x32xf32>
    %5 = vector.broadcast %4 : vector<1x32xf32> to vector<8x32xf32>
    %6 = arith.subf %0, %5 : vector<8x32xf32>
    %7 = arith.mulf %6, %6 : vector<8x32xf32>
    %cst_2 = arith.constant dense<0.000000e+00> : vector<32xf32>
    %8 = vector.multi_reduction <add>, %7, %cst_2 [0] : vector<8x32xf32> to vector<32xf32>
    %9 = vector.shape_cast %8 : vector<32xf32> to vector<1x32xf32>
    %cst_3 = arith.constant 1.250000e-01 : f32
    %10 = vector.broadcast %cst_3 : f32 to vector<1x32xf32>
    %11 = arith.mulf %9, %10 : vector<1x32xf32>
    %c0_4 = arith.constant 0 : index
    %c0_5 = arith.constant 0 : index
    %12 = vector.load %arg2[%c0_4, %c0_5] : memref<1x32xf32, #tpu.memory_space<vmem>>, vector<1x32xf32>
    %cst_6 = arith.constant 9.99999974E-6 : f32
    %13 = vector.broadcast %cst_6 : f32 to vector<1x32xf32>
    %14 = arith.addf %11, %13 : vector<1x32xf32>
    %15 = math.rsqrt %14 : vector<1x32xf32>
    %16 = arith.mulf %12, %15 : vector<1x32xf32>
    %c0_7 = arith.constant 0 : index
    %c0_8 = arith.constant 0 : index
    %17 = vector.load %arg3[%c0_7, %c0_8] : memref<1x32xf32, #tpu.memory_space<vmem>>, vector<1x32xf32>
    %18 = arith.mulf %4, %16 : vector<1x32xf32>
    %19 = arith.subf %17, %18 : vector<1x32xf32>
    %20 = vector.broadcast %16 : vector<1x32xf32> to vector<8x32xf32>
    %21 = arith.mulf %0, %20 : vector<8x32xf32>
    %22 = vector.broadcast %19 : vector<1x32xf32> to vector<8x32xf32>
    %23 = arith.addf %21, %22 : vector<8x32xf32>
    %c0_9 = arith.constant 0 : index
    %c0_10 = arith.constant 0 : index
    %24 = vector.load %arg4[%c0_9, %c0_10] : memref<8x32xf32, #tpu.memory_space<vmem>>, vector<8x32xf32>
    tpu.vector_store %arg4[%c0_9, %c0_10], %23 {strides = array<i32>} : memref<8x32xf32, #tpu.memory_space<vmem>>, vector<8x32xf32>,
    return
  }
  func.func @transform_0(%arg0: i32) -> (i32, i32) {
    %c0_i32 = arith.constant 0 : i32
    %c0_i32_0 = arith.constant 0 : i32
    return %c0_i32, %arg0 : i32, i32
  }
  func.func @transform_1(%arg0: i32) -> (i32, i32) {
    %c0_i32 = arith.constant 0 : i32
    %c0_i32_0 = arith.constant 0 : i32
    return %c0_i32, %arg0 : i32, i32
  }
  func.func @transform_2(%arg0: i32) -> (i32, i32) {
    %c0_i32 = arith.constant 0 : i32
    %c0_i32_0 = arith.constant 0 : i32
    return %c0_i32, %arg0 : i32, i32
  }
  func.func @transform_3(%arg0: i32) -> (i32, i32) {
    %c0_i32 = arith.constant 0 : i32
    %c0_i32_0 = arith.constant 0 : i32
    return %c0_i32, %arg0 : i32, i32
  }
}

</mosaic_0001>

<llo_original>
// kernel: tpu_custom_call.1
$region0: #{tpu_custom_call.1}
  #allocation0 [shape = 'u32[]', space=smem, size = 0x4, offset = 0x4, fixed_abs, tag = 'smem constant byte address 0x4 - core index']
  #allocation1 [shape = 'u32[144,128]{1,0:T(1,128)}', space=vmem, size = 0x12000, scoped, tag = 'internal scratch']
  %s0 = inlined_call_operand.hbm [shape: f32[8,32], index: 0, kind: input, shape index: {}]
  %s1 = inlined_call_operand.vmem [shape: f32[1,32], index: 1, kind: input, shape index: {}]
  %s2 = inlined_call_operand.vmem [shape: f32[1,32], index: 2, kind: input, shape index: {}]
  %s3 = inlined_call_operand.hbm [shape: f32[8,32], index: 3, kind: output, shape index: {}]
  %s4 = sld [smem:[#allocation0]]
  $region26: #{tpu_custom_call.1} parent=0
    _
  %s6 = ssub.s32 1, %s4
  %s7 = scalar_select 0, %s6, %s4
  $region1: #{tpu_custom_call.1} parent=0
    #allocation2 [shape = 'u8[4096]{0}', space=vmem, size = 0x1000, scoped, tag = 'input window, operand 0, single buffered']
    #allocation3 [shape = 's32[1]{0}', space=sflag, size = 0x4, scoped, tag = 'scoped memory for tpu_custom_call.1']
    #allocation4 [shape = 's32[1]{0}', space=sflag, size = 0x4, scoped, tag = 'scoped memory for tpu_custom_call.1']
    #allocation5 [shape = 'u8[4096]{0}', space=vmem, size = 0x1000, scoped, tag = 'output window, operand 0, single buffered']
    %8 = vsyncpa [#allocation3], 0
    %9 = vsyncpa [#allocation4], 0
    // Predicated region
    $region2: #{tpu_custom_call.1} parent=1 // pred_check
      _
    $region3: #{tpu_custom_call.1} parent=1 // pred_check_branch
      %11 = sbr.rel (0) target = $region5
    $region4: #{tpu_custom_call.1} parent=1 // pred_region
      %s13 = ssub.s32 128, 128
      %14 = vsyncadd [#allocation3], %s13
      %s16 = sshll.u32 [#allocation2], 4
      %s17 = int_to_ptr.vmem [resolvable:$true] %s16
      %19 = dma.hbm_to_vmem [thread:$0]  %s0, 128, %s17, [#allocation3]
    $region5: #{tpu_custom_call.1} parent=1 // pred_fallthru
      _
    // Predicated region
    $region6: #{tpu_custom_call.1} parent=1 // pred_check
      _
    $region7: #{tpu_custom_call.1} parent=1 // pred_check_branch
      %21 = sbr.rel (0) target = $region9
    $region8: #{tpu_custom_call.1} parent=1 // pred_region
      _
    $region9: #{tpu_custom_call.1} parent=1 // pred_fallthru
      _
    // Predicated region
    $region10: #{tpu_custom_call.1} parent=1 // pred_check
      _
    $region11: #{tpu_custom_call.1} parent=1 // pred_check_branch
      %23 = sbr.rel (0) target = $region13
    $region12: #{tpu_custom_call.1} parent=1 // pred_region
      _
    $region13: #{tpu_custom_call.1} parent=1 // pred_fallthru
      _
    // Predicated region
    $region14: #{tpu_custom_call.1} parent=1 // pred_check
      _
    $region15: #{tpu_custom_call.1} parent=1 // pred_check_branch
      %25 = sbr.rel (0) target = $region17
    $region16: #{tpu_custom_call.1} parent=1 // pred_region
      %26 = dma.done [#allocation3], 128
    $region17: #{tpu_custom_call.1} parent=1 // pred_fallthru
      _
    %v27 = vld [vmem:[#allocation2] sm:$0xff]
    %vm28 = vcmask 261120
    %v29 = vsel %vm28, %v27, 0.0
    %v30 = vrot.slane %v29, 4
    %v31 = vadd.f32 %v29, %v30
    %v32 = vrot.slane %v31, 2
    %v33 = vadd.f32 %v31, %v32
    %v34 = vrot.slane %v33, 1
    %v35 = vadd.f32 %v33, %v34
    %v36 = vmul.f32 %v35, 0.125
    %v37 = vsub.f32 %v27, %v36
    %v38 = vmul.f32 %v37, %v37
    %v39 = vsel %vm28, %v38, 0.0
    %v40 = vrot.slane %v39, 4
    %v41 = vadd.f32 %v39, %v40
    %v42 = vrot.slane %v41, 2
    %v43 = vadd.f32 %v41, %v42
    %v44 = vrot.slane %v43, 1
    %v45 = vadd.f32 %v43, %v44
    %v46 = vmul.f32 %v45, 0.125
    %v47 = vld [vmem:[%s1] sm:$0x1]
    %v48 = vadd.f32 %v46, 1e-05
    %v49 = vrsqrt.pop %v48
    %v50 = vmul.f32 %v47, %v49
    %v51 = vld [vmem:[%s2] sm:$0x1]
    %v52 = vmul.f32 %v36, %v50
    %v53 = vsub.f32 %v51, %v52
    %v55 = vlaneseq
    %v56 = vshrl.u32 %v55, 7
    %v57 = vsub.s32 0, %v56
    %v58 = vrot.slane %v50, %v57
    %v60 = vmul.f32 %v27, %v58
    %v62 = vlaneseq
    %v63 = vshrl.u32 %v62, 7
    %v64 = vsub.s32 0, %v63
    %v65 = vrot.slane %v53, %v64
    %v67 = vadd.f32 %v60, %v65
    %68 = vst.msk [vmem:[#allocation5] sm:$0xff] %vm28, %v67
    // Predicated region
    $region18: #{tpu_custom_call.1} parent=1 // pred_check
      _
    $region19: #{tpu_custom_call.1} parent=1 // pred_check_branch
      %70 = sbr.rel (0) target = $region21
    $region20: #{tpu_custom_call.1} parent=1 // pred_region
      %s72 = ssub.s32 128, 128
      %73 = vsyncadd [#allocation4], %s72
      %s75 = sshll.u32 [#allocation5], 4
      %s76 = int_to_ptr.vmem [resolvable:$true] %s75
      %78 = dma.vmem_to_hbm [thread:$0]  %s76, 128, %s3, [#allocation4]
    $region21: #{tpu_custom_call.1} parent=1 // pred_fallthru
      _
    // Predicated region
    $region22: #{tpu_custom_call.1} parent=1 // pred_check
      _
    $region23: #{tpu_custom_call.1} parent=1 // pred_check_branch
      %80 = sbr.rel (0) target = $region25
    $region24: #{tpu_custom_call.1} parent=1 // pred_region
      %81 = dma.done [#allocation4], 128
    $region25: #{tpu_custom_call.1} parent=1 // pred_fallthru
      _
    %82 = vsyncpa [#allocation3], 1
    %83 = vsyncpa [#allocation4], 1

</llo_original>
